<compile_context>
chip_gen: v5e
topology: v5e:2x2
jax: 0.10.0
libtpu: 0.0.40
codegen_flags: <defaults>
</compile_context>

<pallas_src>
import functools
import math

import jax
import jax.numpy as jnp
from jax.experimental import pallas as pl
from jax.experimental.pallas import tpu as pltpu


# Scoped-VMEM request: above the 32 MiB default (v6e/v7x) so large dst tiles can
# double-buffer, comfortably below every generation's physical VMEM (64 MiB v7x).
_VMEM_LIMIT_BYTES = 48 * 1024 * 1024


def _pick_tile(n, max_tile=128):
    """Row-tile size for the node / destination grids."""
    if n <= max_tile:
        return n
    # TODO(synk): pad ragged N to a tile multiple instead of asserting.
    assert n % max_tile == 0, "N must be a multiple of the row tile"
    return max_tile


# -----------------------------------------------------------------------------
# Kernel 1 (per layer): node projections (fc / attn_l / attn_r / residual fc).
# -----------------------------------------------------------------------------
def _proj_kernel(x_ref, wfc_ref, alr_ref, wres_ref,
                 feat_ref, el_ref, er_ref, res_ref, *, num_heads, out_feats):
    H, F = num_heads, out_feats
    x_bf = x_ref[...].astype(jnp.bfloat16)                                    # (T, D_in)
    feat = jnp.dot(x_bf, wfc_ref[...], preferred_element_type=jnp.float32)    # (T, H*F)
    res = jnp.dot(x_bf, wres_ref[...], preferred_element_type=jnp.float32)    # (T, H*F)
    feat_bf = feat.astype(jnp.bfloat16)
    # [el | er] for all heads in a single MXU pass against the block-structured
    # (H*F, 2H) [attn_l | attn_r] matrix.
    elr = jnp.dot(feat_bf, alr_ref[...], preferred_element_type=jnp.float32)  # (T, 2H)
    el_ref[...] = elr[:, :H].T                       # (H, T): lane-dense store
    er_ref[...] = elr[:, H:].T                       # (H, T)
    # Per-head (H, T, F) feature layout for the head-batched aggregation matmul.
    for h in range(H):
        feat_ref[h, :, :] = feat_bf[:, h * F:(h + 1) * F]
    res_ref[...] = res


def _gat_projection(x, wfc, alr, wres, *, num_heads, out_feats, tile):
    n, d_in = x.shape
    H, F = num_heads, out_feats
    hf = H * F
    kernel = functools.partial(_proj_kernel, num_heads=H, out_feats=F)
    return pl.pallas_call(
        kernel,
        grid=(n // tile,),
        in_specs=[
            pl.BlockSpec((tile, d_in), lambda i: (i, 0)),     # node rows for this tile
            pl.BlockSpec((d_in, hf), lambda i: (0, 0)),       # fc weight (resident)
            pl.BlockSpec((hf, 2 * H), lambda i: (0, 0)),      # [attn_l | attn_r]
            pl.BlockSpec((d_in, hf), lambda i: (0, 0)),       # residual fc weight
        ],
        out_specs=[
            pl.BlockSpec((H, tile, F), lambda i: (0, i, 0)),  # per-head source features
            pl.BlockSpec((H, tile), lambda i: (0, i)),        # el^T
            pl.BlockSpec((H, tile), lambda i: (0, i)),        # er^T
            pl.BlockSpec((tile, hf), lambda i: (i, 0)),       # residual projection
        ],
        out_shape=[
            jax.ShapeDtypeStruct((H, n, F), jnp.bfloat16),
            jax.ShapeDtypeStruct((H, n), jnp.float32),
            jax.ShapeDtypeStruct((H, n), jnp.float32),
            jax.ShapeDtypeStruct((n, hf), jnp.float32),
        ],
        compiler_params=pltpu.CompilerParams(
            dimension_semantics=("parallel",),
            vmem_limit_bytes=_VMEM_LIMIT_BYTES),
    )(x, wfc, alr, wres)


# -----------------------------------------------------------------------------
# Kernel 2 (per layer): edge softmax + adjacency re-weighting + aggregation.
# -----------------------------------------------------------------------------
def _attn_kernel(feat_ref, el_ref, er_ref, res_ref, bias_ref, adjT_ref, out_ref,
                 *, num_heads, out_feats, neg_slope, apply_elu):
    H, F = num_heads, out_feats
    el_t = el_ref[...]                                     # (H, N_src) f32
    er_t = er_ref[...]                                     # (H, T_dst) f32
    bias = bias_ref[...].astype(jnp.float32)               # (T_dst, N_src); f32 accumulate

    # All-head logits slab: e[h, v, u] = leaky_relu(el[u,h] + er[v,h]) + bias[v,u]
    e = er_t[:, :, None] + el_t[:, None, :]                # (H, T_dst, N_src)
    e = jnp.where(e > 0, e, neg_slope * e) + bias[None, :, :]
    m = jnp.max(e, axis=-1, keepdims=True)                 # (H, T_dst, 1)
    p = jnp.exp(e - m)                                     # off-edge underflows to 0
    denom = jnp.sum(p, axis=-1, keepdims=True)
    # Guard only matters for isolated destinations (reference would NaN there).
    inv = pl.reciprocal(jnp.maximum(denom, 1e-30), approx=True)   # (H, T_dst, 1), EUP

    # Post-softmax adjacency re-weighting.  The 1/denom softmax normalization is
    # hoisted off the (H,T,N) slab and applied to the (H,T,F) matmul output below.
    a_bf = (p * adjT_ref[...].astype(jnp.float32)[None, :, :]).astype(jnp.bfloat16)

    # Head-batched aggregation: H MXU matmuls (T_dst, N_src) x (N_src, F).
    out_h = jnp.einsum('hvu,huf->hvf', a_bf, feat_ref[...],
                       preferred_element_type=jnp.float32)         # (H, T_dst, F)
    out_h = out_h * inv

    # Lane-dense (T_dst, H*F) slab in flatten layout [h0 f..., h1 f..., ...].
    out = jnp.concatenate([out_h[h] for h in range(H)], axis=-1) + res_ref[...]
    if apply_elu:
        out = jnp.where(out > 0, out, jnp.exp(jnp.minimum(out, 0.0)) - 1.0)
    out_ref[...] = out.astype(out_ref.dtype)               # single 128-lane-wide store


def _gat_attention(feat_hnf, el_t, er_t, res, bias, adjT, *, num_heads, out_feats,
                   neg_slope, apply_elu, out_dtype, tile):
    H, F = num_heads, out_feats
    hf = H * F
    n = res.shape[0]
    kernel = functools.partial(_attn_kernel, num_heads=H, out_feats=F,
                               neg_slope=neg_slope, apply_elu=apply_elu)
    return pl.pallas_call(
        kernel,
        grid=(n // tile,),
        in_specs=[
            pl.BlockSpec((H, n, F), lambda i: (0, 0, 0)),  # all source features (resident)
            pl.BlockSpec((H, n), lambda i: (0, 0)),        # el for all sources (resident)
            pl.BlockSpec((H, tile), lambda i: (0, i)),     # er for this dst tile
            pl.BlockSpec((tile, hf), lambda i: (i, 0)),    # residual rows
            pl.BlockSpec((tile, n), lambda i: (i, 0)),     # additive edge bias rows (bf16)
            pl.BlockSpec((tile, n), lambda i: (i, 0)),     # adjacency re-weight rows (bf16)
        ],
        out_specs=pl.BlockSpec((tile, hf), lambda i: (i, 0)),
        out_shape=jax.ShapeDtypeStruct((n, hf), out_dtype),
        compiler_params=pltpu.CompilerParams(
            dimension_semantics=("parallel",),
            vmem_limit_bytes=_VMEM_LIMIT_BYTES),
    )(feat_hnf, el_t, er_t, res, bias, adjT)


# -----------------------------------------------------------------------------
# Full GAT_adj forward (default config: flatten+ELU layers, last layer mean).
# -----------------------------------------------------------------------------
def gat_adj_forward(feats_in, mask, adj, params, *, hidden_feats=(32, 32),
                    num_heads=(4, 4), neg_slope=0.2, idx=0, max_tile=128):
    n = feats_in.shape[0]
    tile = _pick_tile(n, max_tile)

    # Additive edge bias (0 where edge u->v exists, -1e30 elsewhere) and the
    # post-softmax re-weighting matrix, both bf16: halves the dominant N^2
    # adjacency DMA; -1e30 survives the bf16 cast and e+bias math stays f32.
    bias = jnp.where(mask.T > 0, 0.0, -1e30).astype(jnp.bfloat16)
    if adj is None:
        adjT = jnp.ones((n, n), dtype=jnp.bfloat16)
    else:
        adjT = adj[idx:idx + n, idx:idx + n].T.astype(jnp.bfloat16)

    x = feats_in.astype(jnp.float32)
    n_layers = len(hidden_feats)
    for li in range(n_layers):
        H, F = num_heads[li], hidden_feats[li]
        wfc, alr, wres = (w.astype(jnp.bfloat16) for w in params[li])
        feat_hnf, el_t, er_t, res = _gat_projection(
            x, wfc, alr, wres, num_heads=H, out_feats=F, tile=tile)
        last = li == n_layers - 1
        out = _gat_attention(
            feat_hnf, el_t, er_t, res, bias, adjT,
            num_heads=H, out_feats=F, neg_slope=neg_slope,
            apply_elu=not last,                              # ELU on flatten layers only
            out_dtype=jnp.float32 if last else jnp.bfloat16, # bf16 activation round trip
            tile=tile)
        if last:
            # agg_mode == 'mean' (no activation): cheap head-mean in the wrapper so the
            # kernel store stays 128-lane dense.
            x = out.reshape(n, H, F).mean(axis=1)
        else:
            # agg_mode == 'flatten': (N, H*F) is already in the flattened layout.
            x = out
    return x


# -----------------------------------------------------------------------------
# Parameter construction (matches nn.Linear / xavier_normal_ of the reference).
# -----------------------------------------------------------------------------
def xavier_normal(key, shape, fan_in, fan_out, gain=math.sqrt(2.0)):
    std = gain * math.sqrt(2.0 / (fan_in + fan_out))
    return std * jax.random.normal(key, shape, dtype=jnp.float32)


def make_layer_params(key, d_in, num_heads, out_feats):
    hf = num_heads * out_feats
    k1, k2, k3, k4 = jax.random.split(key, 4)
    # nn.Linear(d_in, H*F, bias=False).weight is (H*F, d_in); pass transposed (x @ W^T).
    wfc_t = xavier_normal(k1, (d_in, hf), d_in, hf)
    wres_t = xavier_normal(k2, (d_in, hf), d_in, hf)
    attn_l = xavier_normal(k3, (num_heads, out_feats), out_feats, num_heads)
    attn_r = xavier_normal(k4, (num_heads, out_feats), out_feats, num_heads)
    # Block-structured (H*F, 2H) matrix so one matmul yields [el | er]:
    # elr[:, :H] == (feat.view(N,H,F) * attn_l).sum(-1), elr[:, H:] likewise for attn_r.
    eye = jnp.eye(num_heads, dtype=jnp.float32)
    al_mat = (attn_l[:, :, None] * eye[:, None, :]).reshape(hf, num_heads)
    ar_mat = (attn_r[:, :, None] * eye[:, None, :]).reshape(hf, num_heads)
    alr_mat = jnp.concatenate([al_mat, ar_mat], axis=1)
    return wfc_t, alr_mat, wres_t


if __name__ == "__main__":
    key = jax.random.PRNGKey(0)
    N, in_feats = 8, 16
    hidden_feats = (32, 32)
    num_heads = (4, 4)

    k_feat, k_mask, k_adj, k_p0, k_p1 = jax.random.split(key, 5)
    feats = jax.random.normal(k_feat, (N, in_feats), dtype=jnp.float32)
    # Directed graph with guaranteed self-loops (every node has >= 1 incoming edge).
    mask = jax.random.bernoulli(k_mask, 0.5, (N, N)).astype(jnp.float32)
    mask = jnp.maximum(mask, jnp.eye(N, dtype=jnp.float32))     # mask[u, v]: edge u->v
    adj = jax.random.uniform(k_adj, (N, N), dtype=jnp.float32)  # re-weighting matrix, idx=0

    params = [
        make_layer_params(k_p0, in_feats, num_heads[0], hidden_feats[0]),
        make_layer_params(k_p1, hidden_feats[0] * num_heads[0],
                          num_heads[1], hidden_feats[1]),
    ]

    out = gat_adj_forward(feats, mask, adj, params,
                          hidden_feats=hidden_feats, num_heads=num_heads)
    out = jax.block_until_ready(out)
    assert out.shape == (N, hidden_feats[-1])
    assert bool(jnp.all(jnp.isfinite(out)))
    print("KERNEL_OK")
</pallas_src>

<mosaic_0001>
module attributes {stable_mosaic.version = 11 : i64} {
  func.func @_proj_kernel(%arg0: i32, %arg1: memref<8x16xf32, #tpu.memory_space<vmem>>, %arg2: memref<16x128xbf16, #tpu.memory_space<vmem>>, %arg3: memref<128x8xbf16, #tpu.memory_space<vmem>>, %arg4: memref<16x128xbf16, #tpu.memory_space<vmem>>, %arg5: memref<4x8x32xbf16, #tpu.memory_space<vmem>>, %arg6: memref<4x8xf32, #tpu.memory_space<vmem>>, %arg7: memref<4x8xf32, #tpu.memory_space<vmem>>, %arg8: memref<8x128xf32, #tpu.memory_space<vmem>>) attributes {dimension_semantics = [#tpu.dimension_semantics<parallel>], iteration_bounds = array<i64: 1>, scalar_prefetch = 0 : i64, scratch_operands = 0 : i64, tpu.core_type = #tpu.core_type<tc>, window_params = [{transform_indices = @transform_0, window_bounds = array<i64: 8, 16>}, {pipeline_mode = #tpu.pipeline_mode<synchronous>, transform_indices = @transform_1, window_bounds = array<i64: 16, 128>}, {pipeline_mode = #tpu.pipeline_mode<synchronous>, transform_indices = @transform_2, window_bounds = array<i64: 128, 8>}, {pipeline_mode = #tpu.pipeline_mode<synchronous>, transform_indices = @transform_3, window_bounds = array<i64: 16, 128>}, {transform_indices = @transform_4, window_bounds = array<i64: 4, 8, 32>}, {transform_indices = @transform_5, window_bounds = array<i64: 4, 8>}, {transform_indices = @transform_6, window_bounds = array<i64: 4, 8>}, {transform_indices = @transform_7, window_bounds = array<i64: 8, 128>}]} {
    %c0 = arith.constant 0 : index
    %c0_0 = arith.constant 0 : index
    %0 = vector.load %arg1[%c0, %c0_0] : memref<8x16xf32, #tpu.memory_space<vmem>>, vector<8x16xf32>
    %1 = arith.truncf %0 : vector<8x16xf32> to vector<8x16xbf16>
    %c0_1 = arith.constant 0 : index
    %c0_2 = arith.constant 0 : index
    %2 = vector.load %arg2[%c0_1, %c0_2] : memref<16x128xbf16, #tpu.memory_space<vmem>>, vector<16x128xbf16>
    %cst = arith.constant dense<0.000000e+00> : vector<8x128xf32>
    %3 = tpu.matmul %1, %2, %cst {dimension_numbers = #tpu.dot_dimension_numbers<[1], [0], [0], [1], [0, 0, 1, 1], [], []>} : vector<8x16xbf16>, vector<16x128xbf16>, vector<8x128xf32> -> vector<8x128xf32>
    %c0_3 = arith.constant 0 : index
    %c0_4 = arith.constant 0 : index
    %4 = vector.load %arg4[%c0_3, %c0_4] : memref<16x128xbf16, #tpu.memory_space<vmem>>, vector<16x128xbf16>
    %cst_5 = arith.constant dense<0.000000e+00> : vector<8x128xf32>
    %5 = tpu.matmul %1, %4, %cst_5 {dimension_numbers = #tpu.dot_dimension_numbers<[1], [0], [0], [1], [0, 0, 1, 1], [], []>} : vector<8x16xbf16>, vector<16x128xbf16>, vector<8x128xf32> -> vector<8x128xf32>
    %6 = arith.truncf %3 : vector<8x128xf32> to vector<8x128xbf16>
    %c0_6 = arith.constant 0 : index
    %c0_7 = arith.constant 0 : index
    %7 = vector.load %arg3[%c0_6, %c0_7] : memref<128x8xbf16, #tpu.memory_space<vmem>>, vector<128x8xbf16>
    %cst_8 = arith.constant dense<0.000000e+00> : vector<8x8xf32>
    %8 = tpu.matmul %6, %7, %cst_8 {dimension_numbers = #tpu.dot_dimension_numbers<[1], [0], [0], [1], [0, 0, 1, 1], [], []>} : vector<8x128xbf16>, vector<128x8xbf16>, vector<8x8xf32> -> vector<8x8xf32>
    %9 = vector.extract_strided_slice %8 {offsets = [0, 0], sizes = [8, 4], strides = [1, 1]} : vector<8x8xf32> to vector<8x4xf32>
    %10 = tpu.transpose %9, [1, 0] : vector<8x4xf32> -> vector<4x8xf32>
    %c0_9 = arith.constant 0 : index
    %c0_10 = arith.constant 0 : index
    %11 = vector.load %arg6[%c0_9, %c0_10] : memref<4x8xf32, #tpu.memory_space<vmem>>, vector<4x8xf32>
    tpu.vector_store %arg6[%c0_9, %c0_10], %10 {strides = array<i32>} : memref<4x8xf32, #tpu.memory_space<vmem>>, vector<4x8xf32>,
    %12 = vector.extract_strided_slice %8 {offsets = [0, 4], sizes = [8, 4], strides = [1, 1]} : vector<8x8xf32> to vector<8x4xf32>
    %13 = tpu.transpose %12, [1, 0] : vector<8x4xf32> -> vector<4x8xf32>
    %c0_11 = arith.constant 0 : index
    %c0_12 = arith.constant 0 : index
    %14 = vector.load %arg7[%c0_11, %c0_12] : memref<4x8xf32, #tpu.memory_space<vmem>>, vector<4x8xf32>
    tpu.vector_store %arg7[%c0_11, %c0_12], %13 {strides = array<i32>} : memref<4x8xf32, #tpu.memory_space<vmem>>, vector<4x8xf32>,
    %15 = vector.extract_strided_slice %6 {offsets = [0, 0], sizes = [8, 32], strides = [1, 1]} : vector<8x128xbf16> to vector<8x32xbf16>
    %c0_13 = arith.constant 0 : index
    %c0_14 = arith.constant 0 : index
    %c0_15 = arith.constant 0 : index
    %16 = vector.load %arg5[%c0_13, %c0_14, %c0_15] : memref<4x8x32xbf16, #tpu.memory_space<vmem>>, vector<1x8x32xbf16>
    %17 = vector.shape_cast %16 : vector<1x8x32xbf16> to vector<8x32xbf16>
    %18 = vector.shape_cast %15 : vector<8x32xbf16> to vector<1x8x32xbf16>
    tpu.vector_store %arg5[%c0_13, %c0_14, %c0_15], %18 {strides = array<i32>} : memref<4x8x32xbf16, #tpu.memory_space<vmem>>, vector<1x8x32xbf16>,
    %19 = vector.extract_strided_slice %6 {offsets = [0, 32], sizes = [8, 32], strides = [1, 1]} : vector<8x128xbf16> to vector<8x32xbf16>
    %c1 = arith.constant 1 : index
    %c0_16 = arith.constant 0 : index
    %c0_17 = arith.constant 0 : index
    %20 = vector.load %arg5[%c1, %c0_16, %c0_17] : memref<4x8x32xbf16, #tpu.memory_space<vmem>>, vector<1x8x32xbf16>
    %21 = vector.shape_cast %20 : vector<1x8x32xbf16> to vector<8x32xbf16>
    %22 = vector.shape_cast %19 : vector<8x32xbf16> to vector<1x8x32xbf16>
    tpu.vector_store %arg5[%c1, %c0_16, %c0_17], %22 {strides = array<i32>} : memref<4x8x32xbf16, #tpu.memory_space<vmem>>, vector<1x8x32xbf16>,
    %23 = vector.extract_strided_slice %6 {offsets = [0, 64], sizes = [8, 32], strides = [1, 1]} : vector<8x128xbf16> to vector<8x32xbf16>
    %c2 = arith.constant 2 : index
    %c0_18 = arith.constant 0 : index
    %c0_19 = arith.constant 0 : index
    %24 = vector.load %arg5[%c2, %c0_18, %c0_19] : memref<4x8x32xbf16, #tpu.memory_space<vmem>>, vector<1x8x32xbf16>
    %25 = vector.shape_cast %24 : vector<1x8x32xbf16> to vector<8x32xbf16>
    %26 = vector.shape_cast %23 : vector<8x32xbf16> to vector<1x8x32xbf16>
    tpu.vector_store %arg5[%c2, %c0_18, %c0_19], %26 {strides = array<i32>} : memref<4x8x32xbf16, #tpu.memory_space<vmem>>, vector<1x8x32xbf16>,
    %27 = vector.extract_strided_slice %6 {offsets = [0, 96], sizes = [8, 32], strides = [1, 1]} : vector<8x128xbf16> to vector<8x32xbf16>
    %c3 = arith.constant 3 : index
    %c0_20 = arith.constant 0 : index
    %c0_21 = arith.constant 0 : index
    %28 = vector.load %arg5[%c3, %c0_20, %c0_21] : memref<4x8x32xbf16, #tpu.memory_space<vmem>>, vector<1x8x32xbf16>
    %29 = vector.shape_cast %28 : vector<1x8x32xbf16> to vector<8x32xbf16>
    %30 = vector.shape_cast %27 : vector<8x32xbf16> to vector<1x8x32xbf16>
    tpu.vector_store %arg5[%c3, %c0_20, %c0_21], %30 {strides = array<i32>} : memref<4x8x32xbf16, #tpu.memory_space<vmem>>, vector<1x8x32xbf16>,
    %c0_22 = arith.constant 0 : index
    %c0_23 = arith.constant 0 : index
    %31 = vector.load %arg8[%c0_22, %c0_23] : memref<8x128xf32, #tpu.memory_space<vmem>>, vector<8x128xf32>
    tpu.vector_store %arg8[%c0_22, %c0_23], %5 {strides = array<i32>} : memref<8x128xf32, #tpu.memory_space<vmem>>, vector<8x128xf32>,
    return
  }
  func.func @transform_0(%arg0: i32) -> (i32, i32) {
    %c0_i32 = arith.constant 0 : i32
    %c0_i32_0 = arith.constant 0 : i32
    return %arg0, %c0_i32 : i32, i32
  }
  func.func @transform_1(%arg0: i32) -> (i32, i32) {
    %c0_i32 = arith.constant 0 : i32
    %c0_i32_0 = arith.constant 0 : i32
    %c0_i32_1 = arith.constant 0 : i32
    return %c0_i32, %c0_i32_0 : i32, i32
  }
  func.func @transform_2(%arg0: i32) -> (i32, i32) {
    %c0_i32 = arith.constant 0 : i32
    %c0_i32_0 = arith.constant 0 : i32
    %c0_i32_1 = arith.constant 0 : i32
    return %c0_i32, %c0_i32_0 : i32, i32
  }
  func.func @transform_3(%arg0: i32) -> (i32, i32) {
    %c0_i32 = arith.constant 0 : i32
    %c0_i32_0 = arith.constant 0 : i32
    %c0_i32_1 = arith.constant 0 : i32
    return %c0_i32, %c0_i32_0 : i32, i32
  }
  func.func @transform_4(%arg0: i32) -> (i32, i32, i32) {
    %c0_i32 = arith.constant 0 : i32
    %c0_i32_0 = arith.constant 0 : i32
    %c0_i32_1 = arith.constant 0 : i32
    return %c0_i32, %arg0, %c0_i32_0 : i32, i32, i32
  }
  func.func @transform_5(%arg0: i32) -> (i32, i32) {
    %c0_i32 = arith.constant 0 : i32
    %c0_i32_0 = arith.constant 0 : i32
    return %c0_i32, %arg0 : i32, i32
  }
  func.func @transform_6(%arg0: i32) -> (i32, i32) {
    %c0_i32 = arith.constant 0 : i32
    %c0_i32_0 = arith.constant 0 : i32
    return %c0_i32, %arg0 : i32, i32
  }
  func.func @transform_7(%arg0: i32) -> (i32, i32) {
    %c0_i32 = arith.constant 0 : i32
    %c0_i32_0 = arith.constant 0 : i32
    return %arg0, %c0_i32 : i32, i32
  }
}

</mosaic_0001>

<llo_original>
// kernel: tpu_custom_call.1
$region0: #{tpu_custom_call.1}
  #allocation0 [shape = 'u32[]', space=smem, size = 0x4, offset = 0x4, fixed_abs, tag = 'smem constant byte address 0x4 - core index']
  #allocation1 [shape = 'u32[72,128]{1,0:T(1,128)}', space=vmem, size = 0x9000, scoped, tag = 'internal scratch']
  %s0 = inlined_call_operand.vmem [shape: f32[8,16], index: 0, kind: input, shape index: {}]
  %s1 = inlined_call_operand.vmem [shape: bf16[16,128], index: 1, kind: input, shape index: {}]
  %s2 = inlined_call_operand.vmem [shape: bf16[128,8], index: 2, kind: input, shape index: {}]
  %s3 = inlined_call_operand.vmem [shape: bf16[16,128], index: 3, kind: input, shape index: {}]
  %s4 = inlined_call_operand.hbm [shape: bf16[4,8,32], index: 4, kind: output, shape index: {0}]
  %s5 = inlined_call_operand.hbm [shape: f32[4,8], index: 5, kind: output, shape index: {1}]
  %s6 = inlined_call_operand.hbm [shape: f32[4,8], index: 6, kind: output, shape index: {2}]
  %s7 = inlined_call_operand.hbm [shape: f32[8,128], index: 7, kind: output, shape index: {3}]
  %8 = xla_tuple %s4, %s5, %s6, %s7
  %s9 = sld [smem:[#allocation0]]
  $region50: #{tpu_custom_call.1} parent=0
    _
  %s11 = ssub.s32 1, %s9
  %s12 = scalar_select 0, %s11, %s9
  $region1: #{tpu_custom_call.1} parent=0
    #allocation2 [shape = 'u8[8192]{0}', space=vmem, size = 0x2000, scoped, tag = 'output window, operand 0, single buffered']
    #allocation3 [shape = 's32[1]{0}', space=sflag, size = 0x4, scoped, tag = 'scoped memory for tpu_custom_call.1']
    #allocation4 [shape = 'u8[2048]{0}', space=vmem, size = 0x800, scoped, tag = 'output window, operand 1, single buffered']
    #allocation5 [shape = 's32[1]{0}', space=sflag, size = 0x4, scoped, tag = 'scoped memory for tpu_custom_call.1']
    #allocation6 [shape = 'u8[2048]{0}', space=vmem, size = 0x800, scoped, tag = 'output window, operand 2, single buffered']
    #allocation7 [shape = 'u8[4096]{0}', space=vmem, size = 0x1000, scoped, tag = 'output window, operand 3, single buffered']
    #allocation8 [shape = 's32[1]{0}', space=sflag, size = 0x4, scoped, tag = 'scoped memory for tpu_custom_call.1']
    %13 = vsyncpa [#allocation3], 0
    %14 = vsyncpa [#allocation5], 0
    %15 = vsyncpa [#allocation8], 0
    // Predicated region
    $region2: #{tpu_custom_call.1} parent=1 // pred_check
      _
    $region3: #{tpu_custom_call.1} parent=1 // pred_check_branch
      %17 = sbr.rel (0) target = $region5
    $region4: #{tpu_custom_call.1} parent=1 // pred_region
      _
    $region5: #{tpu_custom_call.1} parent=1 // pred_fallthru
      _
    // Predicated region
    $region6: #{tpu_custom_call.1} parent=1 // pred_check
      _
    $region7: #{tpu_custom_call.1} parent=1 // pred_check_branch
      %19 = sbr.rel (0) target = $region9
    $region8: #{tpu_custom_call.1} parent=1 // pred_region
      _
    $region9: #{tpu_custom_call.1} parent=1 // pred_fallthru
      _
    // Predicated region
    $region10: #{tpu_custom_call.1} parent=1 // pred_check
      _
    $region11: #{tpu_custom_call.1} parent=1 // pred_check_branch
      %21 = sbr.rel (0) target = $region13
    $region12: #{tpu_custom_call.1} parent=1 // pred_region
      _
    $region13: #{tpu_custom_call.1} parent=1 // pred_fallthru
      _
    // Predicated region
    $region14: #{tpu_custom_call.1} parent=1 // pred_check
      _
    $region15: #{tpu_custom_call.1} parent=1 // pred_check_branch
      %23 = sbr.rel (0) target = $region17
    $region16: #{tpu_custom_call.1} parent=1 // pred_region
      _
    $region17: #{tpu_custom_call.1} parent=1 // pred_fallthru
      _
    %v25 = vld [vmem:[%s0] sm:$0xff]
    %v26 = vpack.c.bf16 %v25, %v25
    %v27 = vld [vmem:[%s1] sm:$0xf]
    %v28 = vld [vmem:[%s1 + $0x4] sm:$0xf]
    %v31 = vunpack.c.l.b16 %v27
    %v32 = vunpack.c.l.b16 %v28
    %v33 = vpack.c.b16 %v32, %v31
    %vm35 = vcmask 130048
    %v37 = vsel %vm35, %v26, 0
    %39 = vmatpush.bf16.msra.mxu0 0
    %40 = vmatpush.bf16.msra.mxu0 0
    %41 = vmatpush.bf16.msra.mxu0 0
    %42 = vmatpush.bf16.msra.mxu0 0
    %43 = vmatpush.bf16.msra.mxu0 0
    %44 = vmatpush.bf16.msra.mxu0 0
    %45 = vmatpush.bf16.msra.mxu0 0
    %46 = vmatpush.bf16.msra.mxu0 %v33
    %47 = vmatmul.bf16.gmra.mxu0 %v37
    %v48 = vpop.f32.mrf.mxu0
    %v49 = vadd.f32 0.0, %v48
    %v50 = vpop.f32.mrf.mxu0
    %51 = vdwg.mxu0
    %v52 = vld [vmem:[%s3] sm:$0xf]
    %v53 = vld [vmem:[%s3 + $0x4] sm:$0xf]
    %v56 = vunpack.c.l.b16 %v52
    %v57 = vunpack.c.l.b16 %v53
    %v58 = vpack.c.b16 %v57, %v56
    %60 = vmatpush.bf16.msra.mxu0 0
    %61 = vmatpush.bf16.msra.mxu0 0
    %62 = vmatpush.bf16.msra.mxu0 0
    %63 = vmatpush.bf16.msra.mxu0 0
    %64 = vmatpush.bf16.msra.mxu0 0
    %65 = vmatpush.bf16.msra.mxu0 0
    %66 = vmatpush.bf16.msra.mxu0 0
    %67 = vmatpush.bf16.msra.mxu0 %v58
    %68 = vmatmul.bf16.gmra.mxu0 %v37
    %v69 = vpop.f32.mrf.mxu0
    %v70 = vadd.f32 0.0, %v69
    %v71 = vpop.f32.mrf.mxu0
    %72 = vdwg.mxu0
    %v73 = vpack.c.bf16 %v49, %v49
    %v74 = vld [vmem:[%s2] sm:$0xf]
    %v75 = vld [vmem:[%s2 + $0x4] sm:$0xf]
    %v76 = vld [vmem:[%s2 + $0x8] sm:$0xf]
    %v77 = vld [vmem:[%s2 + $0xc] sm:$0xf]
    %v78 = vld [vmem:[%s2 + $0x10] sm:$0xf]
    %v79 = vld [vmem:[%s2 + $0x14] sm:$0xf]
    %v80 = vld [vmem:[%s2 + $0x18] sm:$0xf]
    %v81 = vld [vmem:[%s2 + $0x1c] sm:$0xf]
    %v82 = vld [vmem:[%s2 + $0x20] sm:$0xf]
    %v83 = vld [vmem:[%s2 + $0x24] sm:$0xf]
    %v84 = vld [vmem:[%s2 + $0x28] sm:$0xf]
    %v85 = vld [vmem:[%s2 + $0x2c] sm:$0xf]
    %v86 = vld [vmem:[%s2 + $0x30] sm:$0xf]
    %v87 = vld [vmem:[%s2 + $0x34] sm:$0xf]
    %v88 = vld [vmem:[%s2 + $0x38] sm:$0xf]
    %v89 = vld [vmem:[%s2 + $0x3c] sm:$0xf]
    %v106 = vunpack.c.l.b16 %v74
    %v107 = vunpack.c.l.b16 %v75
    %v108 = vunpack.c.l.b16 %v76
    %v109 = vunpack.c.l.b16 %v77
    %v110 = vunpack.c.l.b16 %v78
    %v111 = vunpack.c.l.b16 %v79
    %v112 = vunpack.c.l.b16 %v80
    %v113 = vunpack.c.l.b16 %v81
    %v114 = vunpack.c.l.b16 %v82
    %v115 = vunpack.c.l.b16 %v83
    %v116 = vunpack.c.l.b16 %v84
    %v117 = vunpack.c.l.b16 %v85
    %v118 = vunpack.c.l.b16 %v86
    %v119 = vunpack.c.l.b16 %v87
    %v120 = vunpack.c.l.b16 %v88
    %v121 = vunpack.c.l.b16 %v89
    %v122 = vpack.c.b16 %v107, %v106
    %v123 = vpack.c.b16 %v109, %v108
    %v124 = vpack.c.b16 %v111, %v110
    %v125 = vpack.c.b16 %v113, %v112
    %v126 = vpack.c.b16 %v115, %v114
    %v127 = vpack.c.b16 %v117, %v116
    %v128 = vpack.c.b16 %v119, %v118
    %v129 = vpack.c.b16 %v121, %v120
    %138 = vmatpush.bf16.msra.mxu0 %v129
    %139 = vmatpush.bf16.msra.mxu0 %v128
    %140 = vmatpush.bf16.msra.mxu0 %v127
    %141 = vmatpush.bf16.msra.mxu0 %v126
    %142 = vmatpush.bf16.msra.mxu0 %v125
    %143 = vmatpush.bf16.msra.mxu0 %v124
    %144 = vmatpush.bf16.msra.mxu0 %v123
    %145 = vmatpush.bf16.msra.mxu0 %v122
    %146 = vmatmul.bf16.gmra.mxu0 %v73
    %v147 = vpop.f32.mrf.mxu0
    %v148 = vadd.f32 0.0, %v147
    %v149 = vpop.f32.mrf.mxu0
    %150 = vdwg.mxu0
    %151 = vxpose.xlu0.b32.start [1/16] %v148, 128
    %152 = vxpose.xlu0.b32.cont [2/16] 0.0, 128
    %153 = vxpose.xlu0.b32.cont [3/16] 0.0, 128
    %154 = vxpose.xlu0.b32.cont [4/16] 0.0, 128
    %155 = vxpose.xlu0.b32.cont [5/16] 0.0, 128
    %156 = vxpose.xlu0.b32.cont [6/16] 0.0, 128
    %157 = vxpose.xlu0.b32.cont [7/16] 0.0, 128
    %158 = vxpose.xlu0.b32.cont [8/16] 0.0, 128
    %159 = vxpose.xlu0.b32.cont [9/16] 0.0, 128
    %160 = vxpose.xlu0.b32.cont [10/16] 0.0, 128
    %161 = vxpose.xlu0.b32.cont [11/16] 0.0, 128
    %162 = vxpose.xlu0.b32.cont [12/16] 0.0, 128
    %163 = vxpose.xlu0.b32.cont [13/16] 0.0, 128
    %164 = vxpose.xlu0.b32.cont [14/16] 0.0, 128
    %165 = vxpose.xlu0.b32.cont [15/16] 0.0, 128
    %166 = vxpose.xlu0.b32.end [16/16] 0.0, 128
    %v167 = vpop.trf.xlu0
    %v168 = vpop.trf.xlu0
    %v169 = vpop.trf.xlu0
    %v170 = vpop.trf.xlu0
    %v171 = vpop.trf.xlu0
    %v172 = vpop.trf.xlu0
    %v173 = vpop.trf.xlu0
    %v174 = vpop.trf.xlu0
    %v175 = vpop.trf.xlu0
    %v176 = vpop.trf.xlu0
    %v177 = vpop.trf.xlu0
    %v178 = vpop.trf.xlu0
    %v179 = vpop.trf.xlu0
    %v180 = vpop.trf.xlu0
    %v181 = vpop.trf.xlu0
    %v182 = vpop.trf.xlu0
    %vm183 = vcmask 60416
    %184 = vst.msk [vmem:[#allocation4] sm:$0xf] %vm183, %v167
    %186 = vrot.lane.b32.xlu0 %v148, 124
    %v187 = vpop.permute.xlu0 %186
    %189 = vxpose.xlu0.b32.start [1/16] %v187, 128
    %190 = vxpose.xlu0.b32.cont [2/16] 0.0, 128
    %191 = vxpose.xlu0.b32.cont [3/16] 0.0, 128
    %192 = vxpose.xlu0.b32.cont [4/16] 0.0, 128
    %193 = vxpose.xlu0.b32.cont [5/16] 0.0, 128
    %194 = vxpose.xlu0.b32.cont [6/16] 0.0, 128
    %195 = vxpose.xlu0.b32.cont [7/16] 0.0, 128
    %196 = vxpose.xlu0.b32.cont [8/16] 0.0, 128
    %197 = vxpose.xlu0.b32.cont [9/16] 0.0, 128
    %198 = vxpose.xlu0.b32.cont [10/16] 0.0, 128
    %199 = vxpose.xlu0.b32.cont [11/16] 0.0, 128
    %200 = vxpose.xlu0.b32.cont [12/16] 0.0, 128
    %201 = vxpose.xlu0.b32.cont [13/16] 0.0, 128
    %202 = vxpose.xlu0.b32.cont [14/16] 0.0, 128
    %203 = vxpose.xlu0.b32.cont [15/16] 0.0, 128
    %204 = vxpose.xlu0.b32.end [16/16] 0.0, 128
    %v205 = vpop.trf.xlu0
    %v206 = vpop.trf.xlu0
    %v207 = vpop.trf.xlu0
    %v208 = vpop.trf.xlu0
    %v209 = vpop.trf.xlu0
    %v210 = vpop.trf.xlu0
    %v211 = vpop.trf.xlu0
    %v212 = vpop.trf.xlu0
    %v213 = vpop.trf.xlu0
    %v214 = vpop.trf.xlu0
    %v215 = vpop.trf.xlu0
    %v216 = vpop.trf.xlu0
    %v217 = vpop.trf.xlu0
    %v218 = vpop.trf.xlu0
    %v219 = vpop.trf.xlu0
    %v220 = vpop.trf.xlu0
    %221 = vst.msk [vmem:[#allocation6] sm:$0xf] %vm183, %v205
    %vm222 = vcmask 257024
    %223 = vst.msk [vmem:[#allocation2] sm:$0xf] %vm222, %v73
    %225 = vrot.lane.b32.xlu0 %v73, 96
    %v226 = vpop.permute.xlu0 %225
    %s228 = scalar_lea.vmem [#allocation2], 4
    %229 = vst.msk [vmem:[%s228] sm:$0xf] %vm222, %v226
    %230 = vrot.lane.b32.xlu0 %v73, 64
    %v231 = vpop.permute.xlu0 %230
    %s233 = scalar_lea.vmem [#allocation2], 8
    %234 = vst.msk [vmem:[%s233] sm:$0xf] %vm222, %v231
    %235 = vrot.lane.b32.xlu0 %v73, 32
    %v236 = vpop.permute.xlu0 %235
    %s238 = scalar_lea.vmem [#allocation2], 12
    %239 = vst.msk [vmem:[%s238] sm:$0xf] %vm222, %v236
    %240 = vst [vmem:[#allocation7] sm:$0xff] %v70
    // Predicated region
    $region18: #{tpu_custom_call.1} parent=1 // pred_check
      _
    $region19: #{tpu_custom_call.1} parent=1 // pred_check_branch
      %242 = sbr.rel (0) target = $region21
    $region20: #{tpu_custom_call.1} parent=1 // pred_region
      %244 = vsyncadd [#allocation3], 0
      %s245 = sshll.u32 [#allocation2], 4
      %s246 = int_to_ptr.vmem [resolvable:$true] %s245
      %s247 = sshll.u32 %s4, 4
      %s248 = int_to_ptr.hbm [resolvable:$true] %s247
      %253 = dma.vmem_to_hbm [thread:$0]  %s246, 256, %s248, [#allocation3], 64, 64, 4
    $region21: #{tpu_custom_call.1} parent=1 // pred_fallthru
      _
    // Predicated region
    $region22: #{tpu_custom_call.1} parent=1 // pred_check
      _
    $region23: #{tpu_custom_call.1} parent=1 // pred_check_branch
      %255 = sbr.rel (0) target = $region25
    $region24: #{tpu_custom_call.1} parent=1 // pred_region
      %257 = vsyncadd [#allocation5], 0
      %s259 = sshll.u32 [#allocation4], 4
      %s260 = int_to_ptr.vmem [resolvable:$true] %s259
      %s261 = sshll.u32 %s5, 4
      %s262 = int_to_ptr.hbm [resolvable:$true] %s261
      %264 = dma.vmem_to_hbm [thread:$0]  %s260, 64, %s262, [#allocation5]
    $region25: #{tpu_custom_call.1} parent=1 // pred_fallthru
      _
    // Predicated region
    $region26: #{tpu_custom_call.1} parent=1 // pred_check
      _
    $region27: #{tpu_custom_call.1} parent=1 // pred_check_branch
      %266 = sbr.rel (0) target = $region29
    $region28: #{tpu_custom_call.1} parent=1 // pred_region
      %268 = vsyncadd [#allocation5], 0
      %s270 = sshll.u32 [#allocation6], 4
      %s271 = int_to_ptr.vmem [resolvable:$true] %s270
      %s272 = sshll.u32 %s6, 4
      %s273 = int_to_ptr.hbm [resolvable:$true] %s272
      %275 = dma.vmem_to_hbm [thread:$0]  %s271, 64, %s273, [#allocation5]
    $region29: #{tpu_custom_call.1} parent=1 // pred_fallthru
      _
    // Predicated region
    $region30: #{tpu_custom_call.1} parent=1 // pred_check
      _
    $region31: #{tpu_custom_call.1} parent=1 // pred_check_branch
      %277 = sbr.rel (0) target = $region33
    $region32: #{tpu_custom_call.1} parent=1 // pred_region
      %279 = vsyncadd [#allocation8], 0
      %s281 = sshll.u32 [#allocation7], 4
      %s282 = int_to_ptr.vmem [resolvable:$true] %s281
      %s283 = sshll.u32 %s7, 4
      %s284 = int_to_ptr.hbm [resolvable:$true] %s283
      %286 = dma.vmem_to_hbm [thread:$0]  %s282, 128, %s284, [#allocation8]
    $region33: #{tpu_custom_call.1} parent=1 // pred_fallthru
      _
    // Predicated region
    $region34: #{tpu_custom_call.1} parent=1 // pred_check
      _
    $region35: #{tpu_custom_call.1} parent=1 // pred_check_branch
      %288 = sbr.rel (0) target = $region37
    $region36: #{tpu_custom_call.1} parent=1 // pred_region
      %290 = dma.done [#allocation3], 256
    $region37: #{tpu_custom_call.1} parent=1 // pred_fallthru
      _
    // Predicated region
    $region38: #{tpu_custom_call.1} parent=1 // pred_check
      _
    $region39: #{tpu_custom_call.1} parent=1 // pred_check_branch
      %292 = sbr.rel (0) target = $region41
    $region40: #{tpu_custom_call.1} parent=1 // pred_region
      %294 = dma.done [#allocation5], 64
    $region41: #{tpu_custom_call.1} parent=1 // pred_fallthru
      _
    // Predicated region
    $region42: #{tpu_custom_call.1} parent=1 // pred_check
      _
    $region43: #{tpu_custom_call.1} parent=1 // pred_check_branch
      %296 = sbr.rel (0) target = $region45
    $region44: #{tpu_custom_call.1} parent=1 // pred_region
      %298 = dma.done [#allocation5], 64
    $region45: #{tpu_custom_call.1} parent=1 // pred_fallthru
      _
    // Predicated region
    $region46: #{tpu_custom_call.1} parent=1 // pred_check
      _
    $region47: #{tpu_custom_call.1} parent=1 // pred_check_branch
      %300 = sbr.rel (0) target = $region49
    $region48: #{tpu_custom_call.1} parent=1 // pred_region
      %302 = dma.done [#allocation8], 128
    $region49: #{tpu_custom_call.1} parent=1 // pred_fallthru
      _
    %303 = vsyncpa [#allocation3], 1
    %304 = vsyncpa [#allocation5], 1
    %305 = vsyncpa [#allocation8], 1

</llo_original>
